<compile_context>
chip_gen: v5e
topology: v5e:2x2
jax: 0.10.0
libtpu: 0.0.40
codegen_flags: <defaults>
</compile_context>

<pallas_src>
import functools

import numpy as np
import jax
import jax.numpy as jnp
from jax import lax
from jax.experimental import pallas as pl
from jax.experimental.pallas import tpu as pltpu


_POINTWISE_OPS = ("uv", "vu", "uu", "vv")
_GLOBAL_OPS = ("uG", "vG")
_LOCAL_OPS = ("uL", "vL")
_BINARY_OPS = ("Nu", "Nv", "full")
_FLAT_OPS = set(_POINTWISE_OPS + _GLOBAL_OPS)
_MAT_OPS = set(_LOCAL_OPS + _BINARY_OPS)
_ALL_OPS = _FLAT_OPS | _MAT_OPS
_NEEDS_ADJ = {"uL", "vL", "Nu", "Nv"}

# Largest N for which the flat path keeps its (N^2, N^2) structural operator
# matrix resident in VMEM (f32; N=48 -> ~21 MiB).  Beyond that the structured
# fallback handles the pointwise/global ops too.
_MAX_FLAT_N = 48


def _ceil(a, m):
    return ((a + m - 1) // m) * m


def _tile_bytes(sub, lane):
    """VMEM bytes of an f32 (sub, lane) tile after (8, 128) padding."""
    return _ceil(max(int(sub), 1), 8) * _ceil(max(int(lane), 1), 128) * 4


def _pick_cblk(cout, fits, mult8):
    """Largest divisor of cout that fits the VMEM budget (and the (8,·) block rule)."""
    smallest_ok = None
    for cb in range(cout, 0, -1):
        if cout % cb:
            continue
        if mult8 and cb != cout and cb % 8:
            continue
        if fits(cb):
            return cb
        smallest_ok = cb
    return smallest_ok if smallest_ok is not None else cout


@functools.lru_cache(maxsize=None)
def _structural_matrix(op_type, n):
    """0/1 matrix M (N^2, N^2) with  op(H)_flat[j] = sum_i H_flat[i] * M[i, j]."""
    nn = n * n
    i = np.arange(nn)
    iu, iv = (i // n)[:, None], (i % n)[:, None]
    j = np.arange(nn)
    ju, jv = (j // n)[None, :], (j % n)[None, :]
    if op_type == "vu":        # op[u,v] = H[v,u]
        m = (iu == jv) & (iv == ju)
    elif op_type == "uu":      # op[u,v] = H[u,u]
        m = (iu == iv) & (iu == ju)
    elif op_type == "vv":      # op[u,v] = H[v,v]
        m = (iu == iv) & (iu == jv)
    elif op_type == "uG":      # op[u,v] = sum_w H[u,w]
        m = (iu == ju)
    elif op_type == "vG":      # op[u,v] = sum_w H[w,v]
        m = (iv == jv)
    else:
        raise ValueError(op_type)
    return np.asarray(m, dtype=np.float32)


# ----------------------------------------------------------------------------
# Flat (lane-dense) path: uv, vu, uu, vv, uG, vG
# ----------------------------------------------------------------------------
def _make_flat_kernel(op_type, eps, precision):
    is_uv = op_type == "uv"
    scale = 1.0 + eps

    def kernel(x_ref, w_ref, b_ref, *rest):
        if is_uv:
            (o_ref,) = rest
        else:
            m_ref, o_ref = rest
        xr = jnp.maximum(x_ref[0], 0.0)                       # (Cin, N*N)
        h = jnp.dot(w_ref[...], xr,
                    preferred_element_type=jnp.float32, precision=precision)
        h = h + b_ref[...]                                    # (cblk, N*N)
        if is_uv:
            out = (scale + 1.0) * h
        else:
            op_h = jnp.dot(h, m_ref[...],
                           preferred_element_type=jnp.float32, precision=precision)
            out = scale * h + op_h
        o_ref[0] = out.astype(o_ref.dtype)

    return kernel


def _flat_forward(x, w, b, op_type, eps, cblk, vmem_limit_bytes, precision):
    B, Cin, N, _ = x.shape
    Cout = w.shape[0]
    NN = N * N

    xf = x.reshape(B, Cin, NN)            # free reshape: lane-dense view
    b2 = b.reshape(Cout, 1)
    m = None if op_type == "uv" else jnp.asarray(_structural_matrix(op_type, N))

    x_blk = _tile_bytes(Cin, NN)
    m_blk = 0 if m is None else _tile_bytes(NN, NN)
    budget = int(vmem_limit_bytes * 0.6)

    def fits(cb):
        o_blk = _tile_bytes(cb, NN)
        w_blk = _tile_bytes(cb, Cin)
        b_blk = _tile_bytes(cb, 1)
        return 2 * (x_blk + o_blk + m_blk + w_blk + b_blk) <= budget

    if cblk is None:
        cblk = _pick_cblk(Cout, fits, mult8=True)
    assert Cout % cblk == 0 and (cblk % 8 == 0 or cblk == Cout), (Cout, cblk)
    nct = Cout // cblk

    kernel = _make_flat_kernel(op_type, eps, precision)

    in_arrays = [xf, w, b2]
    in_specs = [
        pl.BlockSpec((1, Cin, NN), lambda bi, ci: (bi, 0, 0)),   # reused over ci
        pl.BlockSpec((cblk, Cin), lambda bi, ci: (ci, 0)),
        pl.BlockSpec((cblk, 1), lambda bi, ci: (ci, 0)),
    ]
    if m is not None:
        in_arrays.append(m)
        in_specs.append(pl.BlockSpec((NN, NN), lambda bi, ci: (0, 0)))

    out = pl.pallas_call(
        kernel,
        out_shape=jax.ShapeDtypeStruct((B, Cout, NN), x.dtype),
        grid=(B, nct),
        in_specs=in_specs,
        out_specs=pl.BlockSpec((1, cblk, NN), lambda bi, ci: (bi, ci, 0)),
        compiler_params=pltpu.CompilerParams(
            dimension_semantics=("parallel", "parallel"),
            vmem_limit_bytes=vmem_limit_bytes),
    )(*in_arrays)
    return out.reshape(B, Cout, N, N)


# ----------------------------------------------------------------------------
# Structured path: uL, vL, Nu, Nv, full (+ fallback for flat ops at large N)
# ----------------------------------------------------------------------------
def _make_structured_kernel(op_type, eps, n, cin, cblk, precision):
    needs_adj = op_type in _NEEDS_ADJ
    needs_xt = op_type == "vu"
    needs_eye = op_type in ("uu", "vv")
    scale = 1.0 + eps
    if op_type == "vL" and n % 8 == 0 and n < 128 and cblk > 1:
        group = max(1, min(cblk, 128 // n))   # lane width of the wide MXU call
    else:
        group = 1

    def kernel(*refs):
        it = iter(refs)
        x_ref = next(it)                              # (1, Cin, N, N) VMEM
        xt_ref = next(it) if needs_xt else None       # (1, Cin, N, N) VMEM
        w_ref = next(it)                              # (Cout*Cin,)    SMEM
        b_ref = next(it)                              # (Cout,)        SMEM
        a_ref = next(it) if needs_adj else None       # (1, N, N)      VMEM
        o_ref = next(it)                              # (1, cblk, N, N)
        xr_ref = next(it)                             # (Cin, N, N)    VMEM scratch
        xtr_ref = next(it) if needs_xt else None

        c0 = pl.program_id(1) * cblk

        # relu(X) once per grid step into scratch; per-use loads keep vreg
        # pressure bounded instead of holding all Cin slabs live.
        for ci in range(cin):
            xr_ref[ci] = jnp.maximum(x_ref[0, ci], 0.0)
            if needs_xt:
                xtr_ref[ci] = jnp.maximum(xt_ref[0, ci], 0.0)
        a = a_ref[0] if needs_adj else None
        if needs_eye:
            rows = lax.broadcasted_iota(jnp.int32, (n, n), 0)
            cols = lax.broadcasted_iota(jnp.int32, (n, n), 1)
            eye = (rows == cols).astype(jnp.float32)

        def mix(src_ref, c):
            acc = w_ref[(c0 + c) * cin] * src_ref[0]
            for ci in range(1, cin):
                acc = acc + w_ref[(c0 + c) * cin + ci] * src_ref[ci]
            return acc + b_ref[c0 + c]

        if op_type == "vL" and group > 1:
            # Batch the per-channel H_c @ A matmuls into wide sublane-stacked calls.
            for g0 in range(0, cblk, group):
                cs = list(range(g0, min(g0 + group, cblk)))
                hs = [mix(xr_ref, c) for c in cs]
                hw = jnp.concatenate(hs, axis=0)                      # (g*N, N)
                ow = jnp.dot(hw, a, preferred_element_type=jnp.float32,
                             precision=precision)
                for k, c in enumerate(cs):
                    o_ref[0, c] = (scale * hs[k]
                                   + ow[k * n:(k + 1) * n, :]).astype(o_ref.dtype)
            return

        for c in range(cblk):
            hc = mix(xr_ref, c)
            if op_type == "uv":
                opc = hc
            elif op_type == "vu":
                opc = mix(xtr_ref, c)      # ReLULin(X^T) == ReLULin(X)^T
            elif op_type == "uu":
                opc = jnp.broadcast_to(
                    jnp.sum(hc * eye, axis=1, keepdims=True), (n, n))
            elif op_type == "vv":
                opc = jnp.broadcast_to(
                    jnp.sum(hc * eye, axis=0, keepdims=True), (n, n))
            elif op_type == "uG":
                opc = jnp.broadcast_to(jnp.sum(hc, axis=1, keepdims=True), (n, n))
            elif op_type == "vG":
                opc = jnp.broadcast_to(jnp.sum(hc, axis=0, keepdims=True), (n, n))
            elif op_type == "uL":
                opc = jnp.dot(a, hc, preferred_element_type=jnp.float32,
                              precision=precision)
            elif op_type == "vL":
                opc = jnp.dot(hc, a, preferred_element_type=jnp.float32,
                              precision=precision)
            elif op_type == "Nu":
                opc = jnp.dot(a * hc, hc, preferred_element_type=jnp.float32,
                              precision=precision)
            elif op_type == "Nv":
                opc = jnp.dot(hc, a * hc, preferred_element_type=jnp.float32,
                              precision=precision)
            elif op_type == "full":
                opc = jnp.dot(hc, hc, preferred_element_type=jnp.float32,
                              precision=precision)
            else:
                raise ValueError(op_type)
            o_ref[0, c] = (scale * hc + opc).astype(o_ref.dtype)

    return kernel


def _structured_forward(x, w, b, op_type, eps, a, cblk, vmem_limit_bytes, precision):
    B, Cin, N, _ = x.shape
    Cout = w.shape[0]
    needs_adj = op_type in _NEEDS_ADJ
    needs_xt = op_type == "vu"

    if needs_adj:
        if a is None:
            raise ValueError(f"op_type {op_type!r} requires adjacency A")
        assert a.shape == (B, N, N), a.shape

    tile = _tile_bytes(N, N)
    x_blk = Cin * tile
    xt_blk = x_blk if needs_xt else 0
    a_blk = tile if needs_adj else 0
    scratch = (2 if needs_xt else 1) * Cin * tile
    budget = int(vmem_limit_bytes * 0.6)

    def fits(cb):
        return 2 * (x_blk + xt_blk + a_blk + cb * tile) + scratch <= budget

    if cblk is None:
        cblk = _pick_cblk(Cout, fits, mult8=False)
    assert Cout % cblk == 0, (Cout, cblk)
    nct = Cout // cblk

    kernel = _make_structured_kernel(op_type, eps, N, Cin, cblk, precision)

    smem = pl.BlockSpec(memory_space=pltpu.MemorySpace.SMEM)
    in_arrays = [x]
    in_specs = [pl.BlockSpec((1, Cin, N, N), lambda bi, ci: (bi, 0, 0, 0))]
    if needs_xt:
        in_arrays.append(jnp.transpose(x, (0, 1, 3, 2)))
        in_specs.append(pl.BlockSpec((1, Cin, N, N), lambda bi, ci: (bi, 0, 0, 0)))
    in_arrays += [w.reshape(-1), b]      # flat 1-D SMEM: avoids (·,128) SMEM padding
    in_specs += [smem, smem]
    if needs_adj:
        in_arrays.append(a)
        in_specs.append(pl.BlockSpec((1, N, N), lambda bi, ci: (bi, 0, 0)))

    scratch_shapes = [pltpu.VMEM((Cin, N, N), jnp.float32)]
    if needs_xt:
        scratch_shapes.append(pltpu.VMEM((Cin, N, N), jnp.float32))

    return pl.pallas_call(
        kernel,
        out_shape=jax.ShapeDtypeStruct((B, Cout, N, N), x.dtype),
        grid=(B, nct),
        in_specs=in_specs,
        out_specs=pl.BlockSpec((1, cblk, N, N), lambda bi, ci: (bi, ci, 0, 0)),
        scratch_shapes=scratch_shapes,
        compiler_params=pltpu.CompilerParams(
            dimension_semantics=("parallel", "parallel"),
            vmem_limit_bytes=vmem_limit_bytes),
    )(*in_arrays)


# ----------------------------------------------------------------------------
# Public entry point
# ----------------------------------------------------------------------------
def op_layer_forward(x, w, b, op_type, eps=0.0, a=None, *, cblk=None,
                     vmem_limit_bytes=48 * 1024 * 1024, precision=None):
    """Fused OpLayer forward: output = (1+eps)*ReLULin(X) + op(ReLULin(X)[, A])."""
    if op_type not in _ALL_OPS:
        raise ValueError(f"unknown op_type {op_type!r}")
    B, Cin, N, N2 = x.shape
    assert N == N2, x.shape
    Cout, Cin_w = w.shape
    assert Cin_w == Cin, (w.shape, x.shape)
    eps = float(eps)
    if op_type in _FLAT_OPS and (op_type == "uv" or N <= _MAX_FLAT_N):
        return _flat_forward(x, w, b, op_type, eps, cblk, vmem_limit_bytes,
                             precision)
    return _structured_forward(x, w, b, op_type, eps, a, cblk, vmem_limit_bytes,
                               precision)


class OpLayerPallas:
    """Pallas/TPU port of local_fwl2.layers.OpLayer (forward pass only)."""

    def __init__(self, in_channels, out_channels, op_type, norm="no", eps=0.0,
                 *, key, cblk=None):
        if op_type not in _ALL_OPS:
            raise ValueError(f"unknown op_type {op_type!r}")
        if norm != "no":
            # TODO(synk): instance/batch-norm variants of utils.ReLULin not implemented.
            raise NotImplementedError("only norm='no' is implemented")
        self.op_type = op_type
        self.eps = float(eps)
        self.cblk = cblk
        kw, kb = jax.random.split(key)
        bound = 1.0 / (in_channels ** 0.5)
        self.w = jax.random.uniform(
            kw, (out_channels, in_channels), jnp.float32, -bound, bound)
        self.b = jax.random.uniform(
            kb, (out_channels,), jnp.float32, -bound, bound)

    def __call__(self, X, A=None):
        return op_layer_forward(X, self.w, self.b, self.op_type, self.eps, A,
                                cblk=self.cblk)


# ----------------------------------------------------------------------------
# Pure-JAX reference (for the self-check)
# ----------------------------------------------------------------------------
def _reference_forward(x, w, b, op_type, eps, a=None):
    hp = jax.lax.Precision.HIGHEST
    h = jnp.einsum("oc,bcuv->bouv", w, jnp.maximum(x, 0.0), precision=hp)
    h = h + b[None, :, None, None]
    if op_type == "uv":
        op = h
    elif op_type == "vu":
        op = jnp.swapaxes(h, -1, -2)
    elif op_type == "uu":
        d = jnp.einsum("bcuu->bcu", h)
        op = jnp.broadcast_to(d[:, :, :, None], h.shape)
    elif op_type == "vv":
        d = jnp.einsum("bcuu->bcu", h)
        op = jnp.broadcast_to(d[:, :, None, :], h.shape)
    elif op_type == "uG":
        op = jnp.broadcast_to(jnp.sum(h, axis=-1, keepdims=True), h.shape)
    elif op_type == "vG":
        op = jnp.broadcast_to(jnp.sum(h, axis=-2, keepdims=True), h.shape)
    elif op_type == "uL":
        op = jnp.einsum("buw,bcwv->bcuv", a, h, precision=hp)
    elif op_type == "vL":
        op = jnp.einsum("bcuw,bwv->bcuv", h, a, precision=hp)
    elif op_type == "Nu":
        op = jnp.einsum("buw,bcuw,bcwv->bcuv", a, h, h, precision=hp)
    elif op_type == "Nv":
        op = jnp.einsum("bwv,bcuw,bcwv->bcuv", a, h, h, precision=hp)
    elif op_type == "full":
        op = jnp.einsum("bcuw,bcwv->bcuv", h, h, precision=hp)
    else:
        raise ValueError(op_type)
    return (1.0 + eps) * h + op


# ----------------------------------------------------------------------------
# Demo / self-check
# ----------------------------------------------------------------------------
if __name__ == "__main__":
    key = jax.random.PRNGKey(0)
    B, Cin, Cout, N = 2, 4, 8, 16
    eps = 0.1
    kx, ka, kp = jax.random.split(key, 3)

    X = jax.random.normal(kx, (B, Cin, N, N), dtype=jnp.float32)
    # symmetric 0/1 adjacency with empty diagonal
    Araw = (jax.random.uniform(ka, (B, N, N)) < 0.3).astype(jnp.float32)
    A = jnp.maximum(Araw, jnp.transpose(Araw, (0, 2, 1))) * \
        (1.0 - jnp.eye(N, dtype=jnp.float32)[None])

    for op_type in ("uv", "vu", "uu", "vv", "uG", "vG",
                    "uL", "vL", "Nu", "Nv", "full"):
        layer = OpLayerPallas(Cin, Cout, op_type=op_type, norm="no", eps=eps, key=kp)
        y = layer(X, A)
        jax.block_until_ready(y)
        assert y.shape == (B, Cout, N, N), (op_type, y.shape)
        y_ref = _reference_forward(X, layer.w, layer.b, op_type, eps, A)
        err = float(jnp.max(jnp.abs(y - y_ref)))
        assert jnp.allclose(y, y_ref, atol=1e-2, rtol=1e-2), (op_type, err)

    print("KERNEL_OK")
</pallas_src>

<mosaic_0001>
module attributes {stable_mosaic.version = 11 : i64} {
  func.func @kernel(%arg0: i32, %arg1: i32, %arg2: memref<1x4x256xf32, #tpu.memory_space<vmem>>, %arg3: memref<8x4xf32, #tpu.memory_space<vmem>>, %arg4: memref<8x1xf32, #tpu.memory_space<vmem>>, %arg5: memref<1x8x256xf32, #tpu.memory_space<vmem>>) attributes {dimension_semantics = [#tpu.dimension_semantics<parallel>, #tpu.dimension_semantics<parallel>], iteration_bounds = array<i64: 2, 1>, scalar_prefetch = 0 : i64, scratch_operands = 0 : i64, tpu.core_type = #tpu.core_type<tc>, window_params = [{transform_indices = @transform_0, window_bounds = array<i64: 1, 4, 256>}, {transform_indices = @transform_1, window_bounds = array<i64: 8, 4>}, {transform_indices = @transform_2, window_bounds = array<i64: 8, 1>}, {transform_indices = @transform_3, window_bounds = array<i64: 1, 8, 256>}]} {
    %c0 = arith.constant 0 : index
    %c0_0 = arith.constant 0 : index
    %c0_1 = arith.constant 0 : index
    %0 = vector.load %arg2[%c0, %c0_0, %c0_1] : memref<1x4x256xf32, #tpu.memory_space<vmem>>, vector<1x4x256xf32>
    %1 = vector.shape_cast %0 : vector<1x4x256xf32> to vector<4x256xf32>
    %cst = arith.constant 0.000000e+00 : f32
    %2 = vector.broadcast %cst : f32 to vector<4x256xf32>
    %3 = arith.maximumf %1, %2 : vector<4x256xf32>
    %c0_2 = arith.constant 0 : index
    %c0_3 = arith.constant 0 : index
    %4 = vector.load %arg3[%c0_2, %c0_3] : memref<8x4xf32, #tpu.memory_space<vmem>>, vector<8x4xf32>
    %cst_4 = arith.constant dense<0.000000e+00> : vector<8x256xf32>
    %5 = tpu.matmul %4, %3, %cst_4 {dimension_numbers = #tpu.dot_dimension_numbers<[1], [0], [0], [1], [0, 0, 1, 1], [], []>} : vector<8x4xf32>, vector<4x256xf32>, vector<8x256xf32> -> vector<8x256xf32>
    %c0_5 = arith.constant 0 : index
    %c0_6 = arith.constant 0 : index
    %6 = vector.load %arg4[%c0_5, %c0_6] : memref<8x1xf32, #tpu.memory_space<vmem>>, vector<8x1xf32>
    %7 = vector.broadcast %6 : vector<8x1xf32> to vector<8x256xf32>
    %8 = arith.addf %5, %7 : vector<8x256xf32>
    %cst_7 = arith.constant 2.100000e+00 : f32
    %9 = vector.broadcast %cst_7 : f32 to vector<8x256xf32>
    %10 = arith.mulf %9, %8 : vector<8x256xf32>
    %c0_8 = arith.constant 0 : index
    %c0_9 = arith.constant 0 : index
    %c0_10 = arith.constant 0 : index
    %11 = vector.load %arg5[%c0_8, %c0_9, %c0_10] : memref<1x8x256xf32, #tpu.memory_space<vmem>>, vector<1x8x256xf32>
    %12 = vector.shape_cast %11 : vector<1x8x256xf32> to vector<8x256xf32>
    %13 = vector.shape_cast %10 : vector<8x256xf32> to vector<1x8x256xf32>
    tpu.vector_store %arg5[%c0_8, %c0_9, %c0_10], %13 {strides = array<i32>} : memref<1x8x256xf32, #tpu.memory_space<vmem>>, vector<1x8x256xf32>,
    return
  }
  func.func @transform_0(%arg0: i32, %arg1: i32) -> (i32, i32, i32) {
    %c0_i32 = arith.constant 0 : i32
    %c0_i32_0 = arith.constant 0 : i32
    %c0_i32_1 = arith.constant 0 : i32
    return %arg0, %c0_i32, %c0_i32_0 : i32, i32, i32
  }
  func.func @transform_1(%arg0: i32, %arg1: i32) -> (i32, i32) {
    %c0_i32 = arith.constant 0 : i32
    %c0_i32_0 = arith.constant 0 : i32
    return %arg1, %c0_i32 : i32, i32
  }
  func.func @transform_2(%arg0: i32, %arg1: i32) -> (i32, i32) {
    %c0_i32 = arith.constant 0 : i32
    %c0_i32_0 = arith.constant 0 : i32
    return %arg1, %c0_i32 : i32, i32
  }
  func.func @transform_3(%arg0: i32, %arg1: i32) -> (i32, i32, i32) {
    %c0_i32 = arith.constant 0 : i32
    %c0_i32_0 = arith.constant 0 : i32
    return %arg0, %arg1, %c0_i32 : i32, i32, i32
  }
}

</mosaic_0001>

<llo_original>
// kernel: tpu_custom_call.1
$region0: #{tpu_custom_call.1}
  #allocation0 [shape = 'u32[]', space=smem, size = 0x4, offset = 0x4, fixed_abs, tag = 'smem constant byte address 0x4 - core index']
  #allocation1 [shape = 'u32[72,128]{1,0:T(1,128)}', space=vmem, size = 0x9000, scoped, tag = 'internal scratch']
  %s0 = inlined_call_operand.vmem [shape: f32[2,4,256], index: 0, kind: input, shape index: {}]
  %s1 = inlined_call_operand.vmem [shape: f32[8,4], index: 1, kind: input, shape index: {}]
  %s2 = inlined_call_operand.vmem [shape: f32[8,1], index: 2, kind: input, shape index: {}]
  %s3 = inlined_call_operand.hbm [shape: f32[2,8,256], index: 3, kind: output, shape index: {}]
  %s4 = sld [smem:[#allocation0]]
  $region45: #{tpu_custom_call.1} parent=0
    _
  %s6 = ssub.s32 1, %s4
  %s7 = scalar_select 0, %s6, %s4
  $region1: #{tpu_custom_call.1} parent=0
    #allocation2 [shape = 'u8[16384]{0}', space=vmem, size = 0x4000, scoped, tag = 'output window, operand 0']
    #allocation3 [shape = 's32[2]{0}', space=sflag, size = 0x8, scoped, tag = 'scoped memory for tpu_custom_call.1']
    %8 = vsyncpa [#allocation3], 0
    %s9 = scalar_lea.sflag [#allocation3], 1
    %10 = vsyncpa %s9, 0
    loop: start=0, step=1, limit=4
    $region2: #{tpu_custom_call.1} parent=1 // loop_pre_header
      _
    $region3: #{tpu_custom_call.1} parent=1 // loop_header
      %s12 = sphi 0, %s16
      %p13 = scmp.ge.s32.totalorder %s12, 4
      %s19 = sphi 0, %s31
      %s20 = sphi 0, %s27
      %s21 = sphi 0, %s19
      %s22 = sphi 0, %s20
      %s23 = sphi 0, %s21
      %s24 = sphi 0, %s22
      %s34 = sphi 0, %s36
      %s37 = sphi 0, %s34
      %s38 = sphi 0, %s37
      %s54 = sphi 0, %s38
      %s60 = sphi 0, %s62
      %s63 = sphi 0, %s60
      %s64 = sphi 0, %s63
      %s80 = sphi 0, %s64
      %s86 = sphi 0, %s88
      %s89 = sphi 0, %s86
      %s90 = sphi 0, %s89
      %s106 = sphi 0, %s90
      %s114 = sphi 0, %s116
      %s117 = sphi 0, %s114
      %s118 = sphi 0, %s117
      %s134 = sphi 0, %s118
    $region4: #{tpu_custom_call.1} parent=1 // loop_header_branch
      %15 = sbr.rel (%p13) target = $region8
    $region5: #{tpu_custom_call.1} parent=1 // loop_body
      %s17 = ssub.s32 %s12, 1
      %s18 = ssub.s32 %s12, 2
      %s25 = sadd.s32 1, %s20
      %p26 = scmp.ge.s32.totalorder %s25, 1
      %s27 = scalar_select %p26, 0, %s25
      %s28 = sadd.s32 1, %s19
      %s29 = scalar_select %p26, %s28, %s19
      %p30 = scmp.ge.s32.totalorder %s29, 2
      %s31 = scalar_select %p30, 0, %s29
      %s32 = ssub.s32 %s19, %s31
      %p33 = scmp.eq.s32.totalorder %s32, 0
      %s35 = sadd.s32 %s34, 1
      %s36 = scalar_select %p33, %s34, %s35
      %p39 = pneg %p33
      %p40 = scmp.eq.s32.totalorder %s12, 1
      %p41 = por %p39, %p40
      %p42 = scmp.ne.s32.totalorder %s34, %s37
      %p43 = scmp.eq.s32.totalorder %s12, 0
      %p44 = por %p42, %p43
      %p45 = scmp.ne.s32.totalorder %s34, %s37
      %p46 = scmp.eq.s32.totalorder %s17, 1
      %p47 = por %p45, %p46
      %p48 = scmp.ne.s32.totalorder %s37, %s38
      %p49 = scmp.eq.s32.totalorder %s17, 0
      %p50 = por %p48, %p49
      %p51 = scmp.ne.s32.totalorder %s37, %s38
      %p52 = scmp.eq.s32.totalorder %s18, 1
      %p53 = por %p51, %p52
      %p55 = scmp.ne.s32.totalorder %s38, %s54
      %p56 = scmp.eq.s32.totalorder %s18, 0
      %p57 = por %p55, %p56
      %s58 = ssub.s32 %s20, %s27
      %p59 = scmp.eq.s32.totalorder %s58, 0
      %s61 = sadd.s32 %s60, 1
      %s62 = scalar_select %p59, %s60, %s61
      %p65 = pneg %p59
      %p66 = scmp.eq.s32.totalorder %s12, 1
      %p67 = por %p65, %p66
      %p68 = scmp.ne.s32.totalorder %s60, %s63
      %p69 = scmp.eq.s32.totalorder %s12, 0
      %p70 = por %p68, %p69
      %p71 = scmp.ne.s32.totalorder %s60, %s63
      %p72 = scmp.eq.s32.totalorder %s17, 1
      %p73 = por %p71, %p72
      %p74 = scmp.ne.s32.totalorder %s63, %s64
      %p75 = scmp.eq.s32.totalorder %s17, 0
      %p76 = por %p74, %p75
      %p77 = scmp.ne.s32.totalorder %s63, %s64
      %p78 = scmp.eq.s32.totalorder %s18, 1
      %p79 = por %p77, %p78
      %p81 = scmp.ne.s32.totalorder %s64, %s80
      %p82 = scmp.eq.s32.totalorder %s18, 0
      %p83 = por %p81, %p82
      %s84 = ssub.s32 %s20, %s27
      %p85 = scmp.eq.s32.totalorder %s84, 0
      %s87 = sadd.s32 %s86, 1
      %s88 = scalar_select %p85, %s86, %s87
      %p91 = pneg %p85
      %p92 = scmp.eq.s32.totalorder %s12, 1
      %p93 = por %p91, %p92
      %p94 = scmp.ne.s32.totalorder %s86, %s89
      %p95 = scmp.eq.s32.totalorder %s12, 0
      %p96 = por %p94, %p95
      %p97 = scmp.ne.s32.totalorder %s86, %s89
      %p98 = scmp.eq.s32.totalorder %s17, 1
      %p99 = por %p97, %p98
      %p100 = scmp.ne.s32.totalorder %s89, %s90
      %p101 = scmp.eq.s32.totalorder %s17, 0
      %p102 = por %p100, %p101
      %p103 = scmp.ne.s32.totalorder %s89, %s90
      %p104 = scmp.eq.s32.totalorder %s18, 1
      %p105 = por %p103, %p104
      %p107 = scmp.ne.s32.totalorder %s90, %s106
      %p108 = scmp.eq.s32.totalorder %s18, 0
      %p109 = por %p107, %p108
      %s110 = ssub.s32 %s19, %s31
      %s111 = ssub.s32 %s20, %s27
      %s112 = sor.u32 %s110, %s111
      %p113 = scmp.eq.s32.totalorder %s112, 0
      %s115 = sadd.s32 %s114, 1
      %s116 = scalar_select %p113, %s114, %s115
      %p119 = pneg %p113
      %p120 = scmp.eq.s32.totalorder %s12, 1
      %p121 = por %p119, %p120
      %p122 = scmp.ne.s32.totalorder %s114, %s117
      %p123 = scmp.eq.s32.totalorder %s12, 0
      %p124 = por %p122, %p123
      %p125 = scmp.ne.s32.totalorder %s114, %s117
      %p126 = scmp.eq.s32.totalorder %s17, 1
      %p127 = por %p125, %p126
      %p128 = scmp.ne.s32.totalorder %s117, %s118
      %p129 = scmp.eq.s32.totalorder %s17, 0
      %p130 = por %p128, %p129
      %p131 = scmp.ne.s32.totalorder %s117, %s118
      %p132 = scmp.eq.s32.totalorder %s18, 1
      %p133 = por %p131, %p132
      %p135 = scmp.ne.s32.totalorder %s118, %s134
      %p136 = scmp.eq.s32.totalorder %s18, 0
      %p137 = por %p135, %p136
      %p138 = scmp.le.s32.totalorder 1, %s12
      %p139 = scmp.lt.s32.totalorder %s12, 3
      %p140 = pnand %p138, %p139
      %p141 = pneg %p140
      // Predicated region
      $region9: #{tpu_custom_call.1} parent=5 // pred_check
        _
      $region10: #{tpu_custom_call.1} parent=5 // pred_check_branch
        %143 = sbr.rel (%p140) target = $region12
      $region11: #{tpu_custom_call.1} parent=5 // pred_region
        %s144 = ssub.s32 %s12, 1
        // Predicated region
        $region13: #{tpu_custom_call.1} parent=11 // pred_check
          %p145 = pneg %p76
        $region14: #{tpu_custom_call.1} parent=11 // pred_check_branch
          %147 = sbr.rel (%p145) target = $region16
        $region15: #{tpu_custom_call.1} parent=11 // pred_region
          %p148 = scmp.lt.s32.totalorder %s22, 0
          %s149 = scalar_select %p148, %s22, 0
          %s150 = smul.addr %s149, 8
          %s151 = scalar_lea.vmem %s1, %s150
        $region16: #{tpu_custom_call.1} parent=11 // pred_fallthru
          _
        // Predicated region
        $region17: #{tpu_custom_call.1} parent=11 // pred_check
          %p152 = pneg %p102
        $region18: #{tpu_custom_call.1} parent=11 // pred_check_branch
          %154 = sbr.rel (%p152) target = $region20
        $region19: #{tpu_custom_call.1} parent=11 // pred_region
          %p155 = scmp.lt.s32.totalorder %s22, 0
          %s156 = scalar_select %p155, %s22, 0
          %s157 = smul.addr %s156, 8
          %s158 = scalar_lea.vmem %s2, %s157
        $region20: #{tpu_custom_call.1} parent=11 // pred_fallthru
          _
      $region12: #{tpu_custom_call.1} parent=5 // pred_fallthru
        _
      %p159 = scmp.lt.s32.totalorder %s12, 2
      // Predicated region
      $region21: #{tpu_custom_call.1} parent=5 // pred_check
        %p160 = pneg %p159
      $region22: #{tpu_custom_call.1} parent=5 // pred_check_branch
        %162 = sbr.rel (%p160) target = $region24
      $region23: #{tpu_custom_call.1} parent=5 // pred_region
        // Predicated region
        $region25: #{tpu_custom_call.1} parent=23 // pred_check
          %p163 = pneg %p44
        $region26: #{tpu_custom_call.1} parent=23 // pred_check_branch
          %165 = sbr.rel (%p163) target = $region28
        $region27: #{tpu_custom_call.1} parent=23 // pred_region
          %p166 = scmp.lt.s32.totalorder %s19, 1
          %s167 = scalar_select %p166, %s19, 1
          %s168 = smul.addr %s167, 2
          %s169 = smul.addr %s168, 4
          %s170 = scalar_lea.vmem %s0, %s169
        $region28: #{tpu_custom_call.1} parent=23 // pred_fallthru
          _
      $region24: #{tpu_custom_call.1} parent=5 // pred_fallthru
        _
      %p171 = scmp.le.s32.totalorder 1, %s12
      %p172 = scmp.lt.s32.totalorder %s12, 3
      %p173 = pnand %p171, %p172
      %p174 = pneg %p173
      // Predicated region
      $region29: #{tpu_custom_call.1} parent=5 // pred_check
        _
      $region30: #{tpu_custom_call.1} parent=5 // pred_check_branch
        %176 = sbr.rel (%p173) target = $region32
      $region31: #{tpu_custom_call.1} parent=5 // pred_region
        %s177 = ssub.s32 %s12, 1
        %p178 = scmp.lt.s32.totalorder %s21, 1
        %s179 = scalar_select %p178, %s21, 1
        %s180 = smul.addr %s179, 2
        %s181 = smul.addr %s180, 4
        %s182 = scalar_lea.vmem %s0, %s181
        %p183 = pneg %p50
        %p184 = pneg %p47
        %p185 = scmp.lt.s32.totalorder %s22, 0
        %s186 = scalar_select %p185, %s22, 0
        %s187 = smul.addr %s186, 8
        %s188 = scalar_lea.vmem %s1, %s187
        %p189 = pneg %p76
        %p190 = pneg %p73
        %p191 = scmp.lt.s32.totalorder %s22, 0
        %s192 = scalar_select %p191, %s22, 0
        %s193 = smul.addr %s192, 8
        %s194 = scalar_lea.vmem %s2, %s193
        %p195 = pneg %p102
        %p196 = pneg %p99
        %p197 = pneg %p130
        %p198 = pneg %p127
        %s199 = sand.u32 %s117, 1
        %s200 = scalar_lea.sflag [#allocation3], %s199
        %s201 = sand.u32 %s117, 1
        %s202 = smul.addr %s201, 16
        %s203 = scalar_lea.vmem [#allocation2], %s202
        %p204 = scmp.lt.s32.totalorder %s21, 1
        %s205 = scalar_select %p204, %s21, 1
        %s206 = smul.addr %s205, 2
        %s207 = smul.addr %s206, 4
        %s208 = scalar_lea.vmem %s0, %s207
        %p209 = scmp.lt.s32.totalorder %s22, 0
        %s210 = scalar_select %p209, %s22, 0
        %s211 = smul.addr %s210, 8
        %s212 = scalar_lea.vmem %s1, %s211
        %p213 = scmp.lt.s32.totalorder %s22, 0
        %s214 = scalar_select %p213, %s22, 0
        %s215 = smul.addr %s214, 8
        %s216 = scalar_lea.vmem %s2, %s215
        %v217 = vld [vmem:[%s208] sm:$0xff]
        %v218 = vmax.f32 %v217, 0.0
        %v219 = vld [vmem:[%s212] sm:$0xff]
        %v220 = vld [vmem:[%s216] sm:$0xff]
        %222 = vset.pattern.permute.xlu0 0
        %223 = vperm.xlu0 %222, %v220
        %v224 = vpop.permute.xlu0 %223
        %227 = vst [vmem:[#allocation1] ss:$2 sm:$0xff] %v218
        %v228 = vld.sshfl [vmem:[#allocation1] sm:$0xff pattern:$0x75316420]
        %v229 = vld.sshfl [vmem:[#allocation1 + $0x8] sm:$0xff pattern:$0x75316420]
        %vm230 = vcmask 31744
        %v232 = vsel %vm230, %v219, 0
        %vm234 = vcmask 1043456
        %v235 = vsel %vm234, %v228, 0
        %v237 = vsel %vm234, %v229, 0
        %239 = vmatpush.msra.mxu0 0.0
        %240 = vmatpush.msra.mxu0 0.0
        %241 = vmatpush.msra.mxu0 0.0
        %242 = vmatpush.msra.mxu0 0.0
        %243 = vmatpush.msra.mxu0 0.0
        %244 = vmatpush.msra.mxu0 0.0
        %245 = vmatpush.msra.mxu0 0.0
        %246 = vmatpush.msra.mxu0 0.0
        %247 = vmatpush.msra.mxu0 0.0
        %248 = vmatpush.msra.mxu0 0.0
        %249 = vmatpush.msra.mxu0 0.0
        %250 = vmatpush.msra.mxu0 0.0
        %251 = vmatpush.msra.mxu0 0.0
        %252 = vmatpush.msra.mxu0 0.0
        %253 = vmatpush.msra.mxu0 0.0
        %254 = vmatpush.msra.mxu0 %v235
        %255 = vmatmul.f32.gmra.mxu0 %v232
        %v256 = vpop.f32.mrf.mxu0
        %v257 = vadd.f32 %v224, %v256
        %258 = vdwg.mxu0
        %259 = vmatpush.msra.mxu0 0.0
        %260 = vmatpush.msra.mxu0 0.0
        %261 = vmatpush.msra.mxu0 0.0
        %262 = vmatpush.msra.mxu0 0.0
        %263 = vmatpush.msra.mxu0 0.0
        %264 = vmatpush.msra.mxu0 0.0
        %265 = vmatpush.msra.mxu0 0.0
        %266 = vmatpush.msra.mxu0 0.0
        %267 = vmatpush.msra.mxu0 0.0
        %268 = vmatpush.msra.mxu0 0.0
        %269 = vmatpush.msra.mxu0 0.0
        %270 = vmatpush.msra.mxu0 0.0
        %271 = vmatpush.msra.mxu0 0.0
        %272 = vmatpush.msra.mxu0 0.0
        %273 = vmatpush.msra.mxu0 0.0
        %274 = vmatpush.msra.mxu0 %v237
        %275 = vmatmul.f32.gmra.mxu0 %v232
        %v276 = vpop.f32.mrf.mxu0
        %v277 = vadd.f32 %v224, %v276
        %278 = vdwg.mxu0
        %v279 = vmul.f32 %v257, 2.1
        %v280 = vmul.f32 %v277, 2.1
        %281 = vst [vmem:[%s203] sm:$0xff] %v279
        %282 = vst [vmem:[%s203 + $0x8] sm:$0xff] %v280
        %s283 = sand.u32 %s117, 1
        %s284 = scalar_lea.sflag [#allocation3], %s283
        %s285 = sand.u32 %s117, 1
        %s286 = smul.addr %s285, 16
        %s287 = scalar_lea.vmem [#allocation2], %s286
        // Predicated region
        $region33: #{tpu_custom_call.1} parent=31 // pred_check
          %p288 = pneg %p127
        $region34: #{tpu_custom_call.1} parent=31 // pred_check_branch
          %290 = sbr.rel (%p288) target = $region36
        $region35: #{tpu_custom_call.1} parent=31 // pred_region
          %292 = vsyncadd %s284, 0
          %s293 = smul.addr %s22, 2
          %s294 = smul.addr %s21, 2
          %s295 = sadd.s32 %s293, %s294
          %s296 = smul.addr %s295, 8
          %s297 = scalar_lea.hbm %s3, %s296
          %s299 = sshll.u32 %s287, 4
          %s300 = int_to_ptr.vmem [resolvable:$true] %s299
          %s301 = sshll.u32 %s297, 4
          %s302 = int_to_ptr.hbm [resolvable:$true] %s301
          %304 = dma.vmem_to_hbm [thread:$0]  %s300, 256, %s302, %s284
        $region36: #{tpu_custom_call.1} parent=31 // pred_fallthru
          _
      $region32: #{tpu_custom_call.1} parent=5 // pred_fallthru
        _
      %p305 = scmp.le.s32.totalorder 2, %s12
      // Predicated region
      $region37: #{tpu_custom_call.1} parent=5 // pred_check
        %p306 = pneg %p305
      $region38: #{tpu_custom_call.1} parent=5 // pred_check_branch
        %308 = sbr.rel (%p306) target = $region40
      $region39: #{tpu_custom_call.1} parent=5 // pred_region
        %s309 = ssub.s32 %s12, 2
        // Predicated region
        $region41: #{tpu_custom_call.1} parent=39 // pred_check
          %p310 = pneg %p133
        $region42: #{tpu_custom_call.1} parent=39 // pred_check_branch
          %312 = sbr.rel (%p310) target = $region44
        $region43: #{tpu_custom_call.1} parent=39 // pred_region
          %s313 = sand.u32 %s118, 1
          %s314 = scalar_lea.sflag [#allocation3], %s313
          %s315 = sand.u32 %s118, 1
          %s316 = smul.addr %s315, 16
          %s317 = scalar_lea.vmem [#allocation2], %s316
          %319 = dma.done %s314, 256
        $region44: #{tpu_custom_call.1} parent=39 // pred_fallthru
          _
      $region40: #{tpu_custom_call.1} parent=5 // pred_fallthru
        _
    $region6: #{tpu_custom_call.1} parent=1 // loop_footer
      %s16 = sadd.s32 1, %s12
    $region7: #{tpu_custom_call.1} parent=1 // loop_footer_branch
      %11 = sbr.rel target = $region3
    $region8: #{tpu_custom_call.1} parent=1 // loop_exit
      _
    %320 = vsyncpa [#allocation3], 1
    %s321 = scalar_lea.sflag [#allocation3], 1
    %322 = vsyncpa %s321, 1

</llo_original>
